<compile_context>
chip_gen: v7x
topology: tpu7x:2x2x1
jax: 0.10.0
libtpu: 0.0.40
codegen_flags: <defaults>
</compile_context>

<pallas_src>
import functools

import jax
import jax.numpy as jnp
from jax.experimental import pallas as pl
from jax.experimental.pallas import tpu as pltpu


def _round_up(x, m):
    return (x + m - 1) // m * m


def tabmlp1_kernel(x_ref, w1_ref, b1_ref, gamma_ref, beta_ref, w2_ref, b2_ref,
                   o_ref, sum_ref, sq_ref, *, true_b, block_b, padded_b):
    phase = pl.program_id(0)   # 0: accumulate batch stats, 1: normalize+output
    tile = pl.program_id(1)    # batch-tile index

    # ---- layer_1 + ReLU (recomputed in both phases) --------------------------
    # K=12 is zero-padded to the MXU contraction size (<=9% K-utilisation), but
    # the padded MXU pass is still ~3x cheaper than a 12-term VPU MAC chain at
    # these tile sizes, so it stays on the MXU.
    h = jnp.dot(x_ref[...], w1_ref[...], preferred_element_type=jnp.float32)
    h = jnp.maximum(h + b1_ref[...], 0.0)                       # [Bt, H]

    @pl.when((phase == 0) & (tile == 0))
    def _():
        sum_ref[...] = jnp.zeros_like(sum_ref)
        sq_ref[...] = jnp.zeros_like(sq_ref)

    @pl.when(phase == 0)
    def _():
        # Padded rows (zero x) give relu(b1) != 0 and would corrupt the batch
        # statistics -> mask them (only generated when the batch was padded).
        if true_b == padded_b:
            hm = h
        else:
            row = tile * block_b + jax.lax.broadcasted_iota(
                jnp.int32, (block_b, 1), 0)
            hm = jnp.where(row < true_b, h, 0.0)
        sum_ref[...] = sum_ref[...] + jnp.sum(hm, axis=0, keepdims=True)
        sq_ref[...] = sq_ref[...] + jnp.sum(hm * hm, axis=0, keepdims=True)
        # Keep the phase-0 writeback of this (later overwritten) output block
        # deterministic.
        o_ref[...] = jnp.zeros_like(o_ref)

    @pl.when(phase == 1)
    def _():
        inv_b = jnp.float32(1.0 / true_b)
        mean = sum_ref[...] * inv_b                                   # [1, H]
        # Biased variance (training-mode BN normalization), single-pass form.
        var = jnp.maximum(sq_ref[...] * inv_b - mean * mean, 0.0)     # [1, H]
        scale = gamma_ref[...] * jax.lax.rsqrt(var + 1e-5)            # [1, H]
        # Fold the BN affine into layer_out:  out = h . (scale*w2) + const.
        w2s = w2_ref[...] * scale                                     # [1, H]
        const = (jnp.sum((beta_ref[...] - mean * scale) * w2_ref[...],
                         axis=1, keepdims=True)
                 + b2_ref[...])                                       # [1, 1]
        out = jnp.sum(h * w2s, axis=1, keepdims=True) + const         # [Bt, 1]
        o_ref[...] = out.astype(o_ref.dtype)


@functools.partial(jax.jit, static_argnames=("block_b",))
def tabmlp1_forward(x, w1, b1, gamma, beta, w2, b2, *, block_b=512):
    """TabMLP1 forward pass as a single two-phase Pallas kernel."""
    x = x.astype(jnp.float32)
    B, IN = x.shape
    H = w1.shape[1]

    # Batch tile (sublane-aligned); sweep block_b in {512,1024,2048} on-chip.
    bt = min(block_b, _round_up(B, 8))
    b_pad = _round_up(B, bt)
    if b_pad != B:
        x = jnp.pad(x, ((0, b_pad - B), (0, 0)))
    n_tiles = b_pad // bt

    w2_row = w2.reshape(1, H)                     # [H,1] -> lane-major [1,H]

    kernel = functools.partial(tabmlp1_kernel, true_b=B, block_b=bt,
                               padded_b=b_pad)
    const_map = lambda p, t: (0, 0)

    out = pl.pallas_call(
        kernel,
        out_shape=jax.ShapeDtypeStruct((b_pad, 1), jnp.float32),
        grid_spec=pltpu.PrefetchScalarGridSpec(
            num_scalar_prefetch=0,
            grid=(2, n_tiles),                    # (phase, batch tile)
            in_specs=[
                pl.BlockSpec((bt, IN), lambda p, t: (t, 0)),  # x (pipelined)
                pl.BlockSpec((IN, H), const_map),             # w1 (resident)
                pl.BlockSpec((1, H), const_map),              # b1
                pl.BlockSpec((1, H), const_map),              # gamma
                pl.BlockSpec((1, H), const_map),              # beta
                pl.BlockSpec((1, H), const_map),              # w2 (as a row)
                pl.BlockSpec((1, 1), const_map),              # b2
            ],
            out_specs=pl.BlockSpec((bt, 1), lambda p, t: (t, 0)),
            scratch_shapes=[pltpu.VMEM((1, H), jnp.float32),  # sum(h)
                            pltpu.VMEM((1, H), jnp.float32)], # sum(h*h)
        ),
        compiler_params=pltpu.CompilerParams(
            # Both axes must stay serial: batch stats accumulate across tiles
            # in phase 0 and are consumed by every tile in phase 1.
            dimension_semantics=("arbitrary", "arbitrary"),
            vmem_limit_bytes=48 * 1024 * 1024,
        ),
    )(x, w1, b1, gamma, beta, w2_row, b2)
    return out[:B]


def init_params(key, input_shape=12, H=1024):
    """Deterministic parameter init (PyTorch-style uniform fan-in bounds)."""
    k1, k2, k3, k4 = jax.random.split(key, 4)
    bound1 = 1.0 / jnp.sqrt(input_shape)
    w1 = jax.random.uniform(k1, (input_shape, H), jnp.float32, -bound1, bound1)
    b1 = jax.random.uniform(k2, (1, H), jnp.float32, -bound1, bound1)
    gamma = jnp.ones((1, H), jnp.float32)   # BatchNorm1d weight init
    beta = jnp.zeros((1, H), jnp.float32)   # BatchNorm1d bias init
    bound2 = 1.0 / jnp.sqrt(H)
    w2 = jax.random.uniform(k3, (H, 1), jnp.float32, -bound2, bound2)
    b2 = jax.random.uniform(k4, (1, 1), jnp.float32, -bound2, bound2)
    return w1, b1, gamma, beta, w2, b2


def reference_forward(x, w1, b1, gamma, beta, w2, b2):
    h = jnp.maximum(x @ w1 + b1, 0.0)
    mean = jnp.mean(h, axis=0, keepdims=True)
    var = jnp.mean((h - mean) ** 2, axis=0, keepdims=True)
    h = (h - mean) * jax.lax.rsqrt(var + 1e-5) * gamma + beta
    return h @ w2 + b2


if __name__ == "__main__":
    INPUT_SHAPE = 12
    H = 1024

    key = jax.random.PRNGKey(0)
    kx, kp = jax.random.split(key)
    params = init_params(kp, INPUT_SHAPE, H)

    # Primary small test (single batch tile).
    B = 8
    x = jax.random.normal(kx, (B, INPUT_SHAPE), jnp.float32)
    out = jax.block_until_ready(tabmlp1_forward(x, *params))
    ref = reference_forward(x, *params)
    assert out.shape == (B, 1)
    assert jnp.allclose(out, ref, atol=1e-4, rtol=1e-4), (
        f"max abs err {jnp.max(jnp.abs(out - ref))}")

    # Multi-tile + batch-padding path (B not a multiple of the batch tile).
    B2 = 20
    x2 = jax.random.normal(kx, (B2, INPUT_SHAPE), jnp.float32)
    out2 = jax.block_until_ready(tabmlp1_forward(x2, *params, block_b=8))
    ref2 = reference_forward(x2, *params)
    assert out2.shape == (B2, 1)
    assert jnp.allclose(out2, ref2, atol=1e-4, rtol=1e-4), (
        f"max abs err {jnp.max(jnp.abs(out2 - ref2))}")

    print("KERNEL_OK")
</pallas_src>

<mosaic_0001>
module attributes {stable_mosaic.version = 11 : i64} {
  func.func @tabmlp1_kernel(%arg0: i32, %arg1: i32, %arg2: memref<8x12xf32, #tpu.memory_space<vmem>>, %arg3: memref<12x1024xf32, #tpu.memory_space<vmem>>, %arg4: memref<1x1024xf32, #tpu.memory_space<vmem>>, %arg5: memref<1x1024xf32, #tpu.memory_space<vmem>>, %arg6: memref<1x1024xf32, #tpu.memory_space<vmem>>, %arg7: memref<1x1024xf32, #tpu.memory_space<vmem>>, %arg8: memref<1x1xf32, #tpu.memory_space<vmem>>, %arg9: memref<8x1xf32, #tpu.memory_space<vmem>>, %arg10: memref<1x1024xf32, #tpu.memory_space<vmem>>, %arg11: memref<1x1024xf32, #tpu.memory_space<vmem>>) attributes {dimension_semantics = [#tpu.dimension_semantics<arbitrary>, #tpu.dimension_semantics<arbitrary>], iteration_bounds = array<i64: 2, 1>, scalar_prefetch = 0 : i64, scratch_operands = 2 : i64, tpu.core_type = #tpu.core_type<tc>, window_params = [{transform_indices = @transform_0, window_bounds = array<i64: 8, 12>}, {pipeline_mode = #tpu.pipeline_mode<synchronous>, transform_indices = @transform_1, window_bounds = array<i64: 12, 1024>}, {pipeline_mode = #tpu.pipeline_mode<synchronous>, transform_indices = @transform_2, window_bounds = array<i64: 1, 1024>}, {pipeline_mode = #tpu.pipeline_mode<synchronous>, transform_indices = @transform_3, window_bounds = array<i64: 1, 1024>}, {pipeline_mode = #tpu.pipeline_mode<synchronous>, transform_indices = @transform_4, window_bounds = array<i64: 1, 1024>}, {pipeline_mode = #tpu.pipeline_mode<synchronous>, transform_indices = @transform_5, window_bounds = array<i64: 1, 1024>}, {pipeline_mode = #tpu.pipeline_mode<synchronous>, transform_indices = @transform_6, window_bounds = array<i64: 1, 1>}, {transform_indices = @transform_7, window_bounds = array<i64: 8, 1>}]} {
    %c0 = arith.constant 0 : index
    %c0_0 = arith.constant 0 : index
    %0 = vector.load %arg2[%c0, %c0_0] : memref<8x12xf32, #tpu.memory_space<vmem>>, vector<8x12xf32>
    %c0_1 = arith.constant 0 : index
    %c0_2 = arith.constant 0 : index
    %1 = vector.load %arg3[%c0_1, %c0_2] : memref<12x1024xf32, #tpu.memory_space<vmem>>, vector<12x1024xf32>
    %cst = arith.constant dense<0.000000e+00> : vector<8x1024xf32>
    %2 = tpu.matmul %0, %1, %cst {dimension_numbers = #tpu.dot_dimension_numbers<[1], [0], [0], [1], [0, 0, 1, 1], [], []>} : vector<8x12xf32>, vector<12x1024xf32>, vector<8x1024xf32> -> vector<8x1024xf32>
    %c0_3 = arith.constant 0 : index
    %c0_4 = arith.constant 0 : index
    %3 = vector.load %arg4[%c0_3, %c0_4] : memref<1x1024xf32, #tpu.memory_space<vmem>>, vector<1x1024xf32>
    %4 = vector.broadcast %3 : vector<1x1024xf32> to vector<8x1024xf32>
    %5 = arith.addf %2, %4 : vector<8x1024xf32>
    %cst_5 = arith.constant 0.000000e+00 : f32
    %6 = vector.broadcast %cst_5 : f32 to vector<8x1024xf32>
    %7 = arith.maximumf %5, %6 : vector<8x1024xf32>
    %c0_i32 = arith.constant 0 : i32
    %8 = arith.cmpi eq, %arg0, %c0_i32 : i32
    %c0_i32_6 = arith.constant 0 : i32
    %9 = arith.cmpi eq, %arg1, %c0_i32_6 : i32
    %10 = arith.andi %8, %9 : i1
    %11 = arith.extui %10 : i1 to i32
    %c0_i32_7 = arith.constant 0 : i32
    %12 = arith.cmpi ne, %11, %c0_i32_7 : i32
    scf.if %12 {
      %cst_11 = arith.constant 0.000000e+00 : f32
      %19 = vector.broadcast %cst_11 : f32 to vector<1x1024xf32>
      %c0_12 = arith.constant 0 : index
      %c0_13 = arith.constant 0 : index
      %20 = vector.load %arg10[%c0_12, %c0_13] : memref<1x1024xf32, #tpu.memory_space<vmem>>, vector<1x1024xf32>
      tpu.vector_store %arg10[%c0_12, %c0_13], %19 {strides = array<i32>} : memref<1x1024xf32, #tpu.memory_space<vmem>>, vector<1x1024xf32>,
      %cst_14 = arith.constant 0.000000e+00 : f32
      %21 = vector.broadcast %cst_14 : f32 to vector<1x1024xf32>
      %c0_15 = arith.constant 0 : index
      %c0_16 = arith.constant 0 : index
      %22 = vector.load %arg11[%c0_15, %c0_16] : memref<1x1024xf32, #tpu.memory_space<vmem>>, vector<1x1024xf32>
      tpu.vector_store %arg11[%c0_15, %c0_16], %21 {strides = array<i32>} : memref<1x1024xf32, #tpu.memory_space<vmem>>, vector<1x1024xf32>,
    } else {
    }
    %c0_i32_8 = arith.constant 0 : i32
    %13 = arith.cmpi eq, %arg0, %c0_i32_8 : i32
    %14 = arith.extui %13 : i1 to i32
    %c0_i32_9 = arith.constant 0 : i32
    %15 = arith.cmpi ne, %14, %c0_i32_9 : i32
    scf.if %15 {
      %c0_11 = arith.constant 0 : index
      %c0_12 = arith.constant 0 : index
      %19 = vector.load %arg10[%c0_11, %c0_12] : memref<1x1024xf32, #tpu.memory_space<vmem>>, vector<1x1024xf32>
      %cst_13 = arith.constant dense<0.000000e+00> : vector<1024xf32>
      %20 = vector.multi_reduction <add>, %7, %cst_13 [0] : vector<8x1024xf32> to vector<1024xf32>
      %21 = vector.shape_cast %20 : vector<1024xf32> to vector<1x1024xf32>
      %22 = arith.addf %19, %21 : vector<1x1024xf32>
      %c0_14 = arith.constant 0 : index
      %c0_15 = arith.constant 0 : index
      %23 = vector.load %arg10[%c0_14, %c0_15] : memref<1x1024xf32, #tpu.memory_space<vmem>>, vector<1x1024xf32>
      tpu.vector_store %arg10[%c0_14, %c0_15], %22 {strides = array<i32>} : memref<1x1024xf32, #tpu.memory_space<vmem>>, vector<1x1024xf32>,
      %c0_16 = arith.constant 0 : index
      %c0_17 = arith.constant 0 : index
      %24 = vector.load %arg11[%c0_16, %c0_17] : memref<1x1024xf32, #tpu.memory_space<vmem>>, vector<1x1024xf32>
      %25 = arith.mulf %7, %7 : vector<8x1024xf32>
      %cst_18 = arith.constant dense<0.000000e+00> : vector<1024xf32>
      %26 = vector.multi_reduction <add>, %25, %cst_18 [0] : vector<8x1024xf32> to vector<1024xf32>
      %27 = vector.shape_cast %26 : vector<1024xf32> to vector<1x1024xf32>
      %28 = arith.addf %24, %27 : vector<1x1024xf32>
      %c0_19 = arith.constant 0 : index
      %c0_20 = arith.constant 0 : index
      %29 = vector.load %arg11[%c0_19, %c0_20] : memref<1x1024xf32, #tpu.memory_space<vmem>>, vector<1x1024xf32>
      tpu.vector_store %arg11[%c0_19, %c0_20], %28 {strides = array<i32>} : memref<1x1024xf32, #tpu.memory_space<vmem>>, vector<1x1024xf32>,
      %cst_21 = arith.constant 0.000000e+00 : f32
      %30 = vector.broadcast %cst_21 : f32 to vector<8x1xf32>
      %c0_22 = arith.constant 0 : index
      %c0_23 = arith.constant 0 : index
      %31 = vector.load %arg9[%c0_22, %c0_23] : memref<8x1xf32, #tpu.memory_space<vmem>>, vector<8x1xf32>
      tpu.vector_store %arg9[%c0_22, %c0_23], %30 {strides = array<i32>} : memref<8x1xf32, #tpu.memory_space<vmem>>, vector<8x1xf32>,
    } else {
    }
    %c1_i32 = arith.constant 1 : i32
    %16 = arith.cmpi eq, %arg0, %c1_i32 : i32
    %17 = arith.extui %16 : i1 to i32
    %c0_i32_10 = arith.constant 0 : i32
    %18 = arith.cmpi ne, %17, %c0_i32_10 : i32
    scf.if %18 {
      %c0_11 = arith.constant 0 : index
      %c0_12 = arith.constant 0 : index
      %19 = vector.load %arg10[%c0_11, %c0_12] : memref<1x1024xf32, #tpu.memory_space<vmem>>, vector<1x1024xf32>
      %cst_13 = arith.constant 1.250000e-01 : f32
      %20 = vector.broadcast %cst_13 : f32 to vector<1x1024xf32>
      %21 = arith.mulf %19, %20 : vector<1x1024xf32>
      %c0_14 = arith.constant 0 : index
      %c0_15 = arith.constant 0 : index
      %22 = vector.load %arg11[%c0_14, %c0_15] : memref<1x1024xf32, #tpu.memory_space<vmem>>, vector<1x1024xf32>
      %cst_16 = arith.constant 1.250000e-01 : f32
      %23 = vector.broadcast %cst_16 : f32 to vector<1x1024xf32>
      %24 = arith.mulf %22, %23 : vector<1x1024xf32>
      %25 = arith.mulf %21, %21 : vector<1x1024xf32>
      %26 = arith.subf %24, %25 : vector<1x1024xf32>
      %cst_17 = arith.constant 0.000000e+00 : f32
      %27 = vector.broadcast %cst_17 : f32 to vector<1x1024xf32>
      %28 = arith.maximumf %26, %27 : vector<1x1024xf32>
      %c0_18 = arith.constant 0 : index
      %c0_19 = arith.constant 0 : index
      %29 = vector.load %arg5[%c0_18, %c0_19] : memref<1x1024xf32, #tpu.memory_space<vmem>>, vector<1x1024xf32>
      %cst_20 = arith.constant 9.99999974E-6 : f32
      %30 = vector.broadcast %cst_20 : f32 to vector<1x1024xf32>
      %31 = arith.addf %28, %30 : vector<1x1024xf32>
      %32 = math.rsqrt %31 : vector<1x1024xf32>
      %33 = arith.mulf %29, %32 : vector<1x1024xf32>
      %c0_21 = arith.constant 0 : index
      %c0_22 = arith.constant 0 : index
      %34 = vector.load %arg7[%c0_21, %c0_22] : memref<1x1024xf32, #tpu.memory_space<vmem>>, vector<1x1024xf32>
      %35 = arith.mulf %34, %33 : vector<1x1024xf32>
      %c0_23 = arith.constant 0 : index
      %c0_24 = arith.constant 0 : index
      %36 = vector.load %arg6[%c0_23, %c0_24] : memref<1x1024xf32, #tpu.memory_space<vmem>>, vector<1x1024xf32>
      %37 = arith.mulf %21, %33 : vector<1x1024xf32>
      %38 = arith.subf %36, %37 : vector<1x1024xf32>
      %c0_25 = arith.constant 0 : index
      %c0_26 = arith.constant 0 : index
      %39 = vector.load %arg7[%c0_25, %c0_26] : memref<1x1024xf32, #tpu.memory_space<vmem>>, vector<1x1024xf32>
      %40 = arith.mulf %38, %39 : vector<1x1024xf32>
      %cst_27 = arith.constant dense<0.000000e+00> : vector<1xf32>
      %41 = vector.multi_reduction <add>, %40, %cst_27 [1] : vector<1x1024xf32> to vector<1xf32>
      %42 = vector.shape_cast %41 : vector<1xf32> to vector<1x1xf32>
      %c0_28 = arith.constant 0 : index
      %c0_29 = arith.constant 0 : index
      %43 = vector.load %arg8[%c0_28, %c0_29] : memref<1x1xf32, #tpu.memory_space<vmem>>, vector<1x1xf32>
      %44 = arith.addf %42, %43 : vector<1x1xf32>
      %45 = vector.broadcast %35 : vector<1x1024xf32> to vector<8x1024xf32>
      %46 = arith.mulf %7, %45 : vector<8x1024xf32>
      %cst_30 = arith.constant dense<0.000000e+00> : vector<8xf32>
      %47 = vector.multi_reduction <add>, %46, %cst_30 [1] : vector<8x1024xf32> to vector<8xf32>
      %48 = vector.shape_cast %47 : vector<8xf32> to vector<8x1xf32>
      %49 = vector.broadcast %44 : vector<1x1xf32> to vector<8x1xf32>
      %50 = arith.addf %48, %49 : vector<8x1xf32>
      %c0_31 = arith.constant 0 : index
      %c0_32 = arith.constant 0 : index
      %51 = vector.load %arg9[%c0_31, %c0_32] : memref<8x1xf32, #tpu.memory_space<vmem>>, vector<8x1xf32>
      tpu.vector_store %arg9[%c0_31, %c0_32], %50 {strides = array<i32>} : memref<8x1xf32, #tpu.memory_space<vmem>>, vector<8x1xf32>,
    } else {
    }
    return
  }
  func.func @transform_0(%arg0: i32, %arg1: i32) -> (i32, i32) {
    %c0_i32 = arith.constant 0 : i32
    %c0_i32_0 = arith.constant 0 : i32
    return %arg1, %c0_i32 : i32, i32
  }
  func.func @transform_1(%arg0: i32, %arg1: i32) -> (i32, i32) {
    %c0_i32 = arith.constant 0 : i32
    %c0_i32_0 = arith.constant 0 : i32
    %c0_i32_1 = arith.constant 0 : i32
    return %c0_i32, %c0_i32_0 : i32, i32
  }
  func.func @transform_2(%arg0: i32, %arg1: i32) -> (i32, i32) {
    %c0_i32 = arith.constant 0 : i32
    %c0_i32_0 = arith.constant 0 : i32
    %c0_i32_1 = arith.constant 0 : i32
    return %c0_i32, %c0_i32_0 : i32, i32
  }
  func.func @transform_3(%arg0: i32, %arg1: i32) -> (i32, i32) {
    %c0_i32 = arith.constant 0 : i32
    %c0_i32_0 = arith.constant 0 : i32
    %c0_i32_1 = arith.constant 0 : i32
    return %c0_i32, %c0_i32_0 : i32, i32
  }
  func.func @transform_4(%arg0: i32, %arg1: i32) -> (i32, i32) {
    %c0_i32 = arith.constant 0 : i32
    %c0_i32_0 = arith.constant 0 : i32
    %c0_i32_1 = arith.constant 0 : i32
    return %c0_i32, %c0_i32_0 : i32, i32
  }
  func.func @transform_5(%arg0: i32, %arg1: i32) -> (i32, i32) {
    %c0_i32 = arith.constant 0 : i32
    %c0_i32_0 = arith.constant 0 : i32
    %c0_i32_1 = arith.constant 0 : i32
    return %c0_i32, %c0_i32_0 : i32, i32
  }
  func.func @transform_6(%arg0: i32, %arg1: i32) -> (i32, i32) {
    %c0_i32 = arith.constant 0 : i32
    %c0_i32_0 = arith.constant 0 : i32
    %c0_i32_1 = arith.constant 0 : i32
    return %c0_i32, %c0_i32_0 : i32, i32
  }
  func.func @transform_7(%arg0: i32, %arg1: i32) -> (i32, i32) {
    %c0_i32 = arith.constant 0 : i32
    %c0_i32_0 = arith.constant 0 : i32
    return %arg1, %c0_i32 : i32, i32
  }
}

</mosaic_0001>

<llo_original>
// kernel: tabmlp1_forward.1
$region0: #{tabmlp1_forward.1}
  #allocation0 [shape = 'u32[]', space=smem, size = 0x4, offset = 0x4, fixed_abs, tag = 'smem constant byte address 0x4 - core index']
  #allocation1 [shape = 'u32[144,128]{1,0:T(1,128)}', space=vmem, size = 0x12000, scoped, tag = 'internal scratch']
  #allocation2 [shape = 'f32[1,1024]{1,0:T(1,128)}', space=vmem, size = 0x1000, scoped, tag = 'scratch operand']
  #allocation3 [shape = 'f32[1,1024]{1,0:T(1,128)}', space=vmem, size = 0x1000, scoped, tag = 'scratch operand']
  #allocation4 [shape = 'f32[1,1]{1,0:T(1,128)S(1)}', space=vmem, size = 0x200, scoped, tag = 'scoped memory for tabmlp1_forward.1']
  %s0 = inlined_call_operand.hbm [shape: f32[8,12], index: 0, kind: input, shape index: {}]
  %s1 = inlined_call_operand.hbm [shape: f32[12,1024], index: 1, kind: input, shape index: {}]
  %s2 = inlined_call_operand.vmem [shape: f32[1,1024], index: 2, kind: input, shape index: {}]
  %s3 = inlined_call_operand.vmem [shape: f32[1,1024], index: 3, kind: input, shape index: {}]
  %s4 = inlined_call_operand.hbm [shape: f32[1,1024], index: 4, kind: input, shape index: {}]
  %s5 = inlined_call_operand.vmem [shape: f32[1,1024], index: 5, kind: input, shape index: {}]
  %s6 = inlined_call_operand.<no memory space> [shape: f32[1,1], index: 6, kind: input, shape index: {}]
  %s7 = inlined_call_operand.vmem [shape: f32[8,1], index: 7, kind: output, shape index: {}]
  %s8 = sld [smem:[#allocation0]]
  $region85: #{tabmlp1_forward.1} parent=0
    _
  %s10 = ssub.s32 1, %s8
  %s11 = scalar_select 0, %s10, %s8
  %v12 = vstv %s6
  %13 = vst [vmem:[#allocation4] sm:$0x1] %v12
  $region1: #{tabmlp1_forward.1} parent=0
    #allocation5 [shape = 'u8[4096]{0}', space=vmem, size = 0x1000, scoped, tag = 'input window, operand 0, single buffered']
    #allocation6 [shape = 's32[2]{0}', space=sflag, size = 0x8, scoped, tag = 'scoped memory for tabmlp1_forward.1']
    #allocation7 [shape = 'u8[65536]{0}', space=vmem, size = 0x10000, scoped, tag = 'input window, operand 1, single buffered']
    #allocation8 [shape = 's32[1]{0}', space=sflag, size = 0x4, scoped, tag = 'scoped memory for tabmlp1_forward.1']
    #allocation9 [shape = 'u8[4096]{0}', space=vmem, size = 0x1000, scoped, tag = 'input window, operand 4, single buffered']
    %14 = vsyncpa [#allocation6], 0
    %15 = vsyncpa [#allocation8], 0
    loop: start=0, step=1, limit=4
    $region2: #{tabmlp1_forward.1} parent=1 // loop_pre_header
      _
    $region3: #{tabmlp1_forward.1} parent=1 // loop_header
      %s17 = sphi 0, %s21
      %p18 = scmp.ge.s32.totalorder %s17, 4
      %s24 = sphi 0, %s36
      %s25 = sphi 0, %s32
      %s26 = sphi 0, %s24
      %s27 = sphi 0, %s25
      %s28 = sphi 0, %s26
      %s29 = sphi 0, %s27
      %s39 = sphi 0, %s41
      %s42 = sphi 0, %s39
      %s43 = sphi 0, %s42
      %s59 = sphi 0, %s43
      %s63 = sphi 0, %s63
      %s65 = sphi 0, %s63
      %s66 = sphi 0, %s65
      %s80 = sphi 0, %s66
      %s84 = sphi 0, %s84
      %s86 = sphi 0, %s84
      %s87 = sphi 0, %s86
      %s101 = sphi 0, %s87
      %s105 = sphi 0, %s105
      %s107 = sphi 0, %s105
      %s108 = sphi 0, %s107
      %s122 = sphi 0, %s108
      %s126 = sphi 0, %s126
      %s128 = sphi 0, %s126
      %s129 = sphi 0, %s128
      %s143 = sphi 0, %s129
      %s147 = sphi 0, %s147
      %s149 = sphi 0, %s147
      %s150 = sphi 0, %s149
      %s164 = sphi 0, %s150
      %s168 = sphi 0, %s168
      %s170 = sphi 0, %s168
      %s171 = sphi 0, %s170
      %s185 = sphi 0, %s171
      %s191 = sphi 0, %s193
      %s194 = sphi 0, %s191
      %s195 = sphi 0, %s194
      %s211 = sphi 0, %s195
    $region4: #{tabmlp1_forward.1} parent=1 // loop_header_branch
      %20 = sbr.rel (%p18) target = $region8
    $region5: #{tabmlp1_forward.1} parent=1 // loop_body
      %s22 = ssub.s32 %s17, 1
      %s23 = ssub.s32 %s17, 2
      %s30 = sadd.s32 1, %s25
      %p31 = scmp.ge.s32.totalorder %s30, 1
      %s32 = scalar_select %p31, 0, %s30
      %s33 = sadd.s32 1, %s24
      %s34 = scalar_select %p31, %s33, %s24
      %p35 = scmp.ge.s32.totalorder %s34, 2
      %s36 = scalar_select %p35, 0, %s34
      %s37 = ssub.s32 %s25, %s32
      %p38 = scmp.eq.s32.totalorder %s37, 0
      %s40 = sadd.s32 %s39, 1
      %s41 = scalar_select %p38, %s39, %s40
      %p44 = pneg %p38
      %p45 = scmp.eq.s32.totalorder %s17, 1
      %p46 = por %p44, %p45
      %p47 = scmp.ne.s32.totalorder %s39, %s42
      %p48 = scmp.eq.s32.totalorder %s17, 0
      %p49 = por %p47, %p48
      %p50 = scmp.ne.s32.totalorder %s39, %s42
      %p51 = scmp.eq.s32.totalorder %s22, 1
      %p52 = por %p50, %p51
      %p53 = scmp.ne.s32.totalorder %s42, %s43
      %p54 = scmp.eq.s32.totalorder %s22, 0
      %p55 = por %p53, %p54
      %p56 = scmp.ne.s32.totalorder %s42, %s43
      %p57 = scmp.eq.s32.totalorder %s23, 1
      %p58 = por %p56, %p57
      %p60 = scmp.ne.s32.totalorder %s43, %s59
      %p61 = scmp.eq.s32.totalorder %s23, 0
      %p62 = por %p60, %p61
      %s64 = sadd.s32 %s63, 1
      %p67 = scmp.eq.s32.totalorder %s17, 1
      %p68 = scmp.ne.s32.totalorder %s63, %s65
      %p69 = scmp.eq.s32.totalorder %s17, 0
      %p70 = por %p68, %p69
      %p71 = scmp.ne.s32.totalorder %s63, %s65
      %p72 = scmp.eq.s32.totalorder %s22, 1
      %p73 = por %p71, %p72
      %p74 = scmp.ne.s32.totalorder %s65, %s66
      %p75 = scmp.eq.s32.totalorder %s22, 0
      %p76 = por %p74, %p75
      %p77 = scmp.ne.s32.totalorder %s65, %s66
      %p78 = scmp.eq.s32.totalorder %s23, 1
      %p79 = por %p77, %p78
      %p81 = scmp.ne.s32.totalorder %s66, %s80
      %p82 = scmp.eq.s32.totalorder %s23, 0
      %p83 = por %p81, %p82
      %s85 = sadd.s32 %s84, 1
      %p88 = scmp.eq.s32.totalorder %s17, 1
      %p89 = scmp.ne.s32.totalorder %s84, %s86
      %p90 = scmp.eq.s32.totalorder %s17, 0
      %p91 = por %p89, %p90
      %p92 = scmp.ne.s32.totalorder %s84, %s86
      %p93 = scmp.eq.s32.totalorder %s22, 1
      %p94 = por %p92, %p93
      %p95 = scmp.ne.s32.totalorder %s86, %s87
      %p96 = scmp.eq.s32.totalorder %s22, 0
      %p97 = por %p95, %p96
      %p98 = scmp.ne.s32.totalorder %s86, %s87
      %p99 = scmp.eq.s32.totalorder %s23, 1
      %p100 = por %p98, %p99
      %p102 = scmp.ne.s32.totalorder %s87, %s101
      %p103 = scmp.eq.s32.totalorder %s23, 0
      %p104 = por %p102, %p103
      %s106 = sadd.s32 %s105, 1
      %p109 = scmp.eq.s32.totalorder %s17, 1
      %p110 = scmp.ne.s32.totalorder %s105, %s107
      %p111 = scmp.eq.s32.totalorder %s17, 0
      %p112 = por %p110, %p111
      %p113 = scmp.ne.s32.totalorder %s105, %s107
      %p114 = scmp.eq.s32.totalorder %s22, 1
      %p115 = por %p113, %p114
      %p116 = scmp.ne.s32.totalorder %s107, %s108
      %p117 = scmp.eq.s32.totalorder %s22, 0
      %p118 = por %p116, %p117
      %p119 = scmp.ne.s32.totalorder %s107, %s108
      %p120 = scmp.eq.s32.totalorder %s23, 1
      %p121 = por %p119, %p120
      %p123 = scmp.ne.s32.totalorder %s108, %s122
      %p124 = scmp.eq.s32.totalorder %s23, 0
      %p125 = por %p123, %p124
      %s127 = sadd.s32 %s126, 1
      %p130 = scmp.eq.s32.totalorder %s17, 1
      %p131 = scmp.ne.s32.totalorder %s126, %s128
      %p132 = scmp.eq.s32.totalorder %s17, 0
      %p133 = por %p131, %p132
      %p134 = scmp.ne.s32.totalorder %s126, %s128
      %p135 = scmp.eq.s32.totalorder %s22, 1
      %p136 = por %p134, %p135
      %p137 = scmp.ne.s32.totalorder %s128, %s129
      %p138 = scmp.eq.s32.totalorder %s22, 0
      %p139 = por %p137, %p138
      %p140 = scmp.ne.s32.totalorder %s128, %s129
      %p141 = scmp.eq.s32.totalorder %s23, 1
      %p142 = por %p140, %p141
      %p144 = scmp.ne.s32.totalorder %s129, %s143
      %p145 = scmp.eq.s32.totalorder %s23, 0
      %p146 = por %p144, %p145
      %s148 = sadd.s32 %s147, 1
      %p151 = scmp.eq.s32.totalorder %s17, 1
      %p152 = scmp.ne.s32.totalorder %s147, %s149
      %p153 = scmp.eq.s32.totalorder %s17, 0
      %p154 = por %p152, %p153
      %p155 = scmp.ne.s32.totalorder %s147, %s149
      %p156 = scmp.eq.s32.totalorder %s22, 1
      %p157 = por %p155, %p156
      %p158 = scmp.ne.s32.totalorder %s149, %s150
      %p159 = scmp.eq.s32.totalorder %s22, 0
      %p160 = por %p158, %p159
      %p161 = scmp.ne.s32.totalorder %s149, %s150
      %p162 = scmp.eq.s32.totalorder %s23, 1
      %p163 = por %p161, %p162
      %p165 = scmp.ne.s32.totalorder %s150, %s164
      %p166 = scmp.eq.s32.totalorder %s23, 0
      %p167 = por %p165, %p166
      %s169 = sadd.s32 %s168, 1
      %p172 = scmp.eq.s32.totalorder %s17, 1
      %p173 = scmp.ne.s32.totalorder %s168, %s170
      %p174 = scmp.eq.s32.totalorder %s17, 0
      %p175 = por %p173, %p174
      %p176 = scmp.ne.s32.totalorder %s168, %s170
      %p177 = scmp.eq.s32.totalorder %s22, 1
      %p178 = por %p176, %p177
      %p179 = scmp.ne.s32.totalorder %s170, %s171
      %p180 = scmp.eq.s32.totalorder %s22, 0
      %p181 = por %p179, %p180
      %p182 = scmp.ne.s32.totalorder %s170, %s171
      %p183 = scmp.eq.s32.totalorder %s23, 1
      %p184 = por %p182, %p183
      %p186 = scmp.ne.s32.totalorder %s171, %s185
      %p187 = scmp.eq.s32.totalorder %s23, 0
      %p188 = por %p186, %p187
      %s189 = ssub.s32 %s25, %s32
      %p190 = scmp.eq.s32.totalorder %s189, 0
      %s192 = sadd.s32 %s191, 1
      %s193 = scalar_select %p190, %s191, %s192
      %p196 = pneg %p190
      %p197 = scmp.eq.s32.totalorder %s17, 1
      %p198 = por %p196, %p197
      %p199 = scmp.ne.s32.totalorder %s191, %s194
      %p200 = scmp.eq.s32.totalorder %s17, 0
      %p201 = por %p199, %p200
      %p202 = scmp.ne.s32.totalorder %s191, %s194
      %p203 = scmp.eq.s32.totalorder %s22, 1
      %p204 = por %p202, %p203
      %p205 = scmp.ne.s32.totalorder %s194, %s195
      %p206 = scmp.eq.s32.totalorder %s22, 0
      %p207 = por %p205, %p206
      %p208 = scmp.ne.s32.totalorder %s194, %s195
      %p209 = scmp.eq.s32.totalorder %s23, 1
      %p210 = por %p208, %p209
      %p212 = scmp.ne.s32.totalorder %s195, %s211
      %p213 = scmp.eq.s32.totalorder %s23, 0
      %p214 = por %p212, %p213
      %p215 = scmp.le.s32.totalorder 1, %s17
      %p216 = scmp.lt.s32.totalorder %s17, 3
      %p217 = pnand %p215, %p216
      %p218 = pneg %p217
      // Predicated region
      $region9: #{tabmlp1_forward.1} parent=5 // pred_check
        _
      $region10: #{tabmlp1_forward.1} parent=5 // pred_check_branch
        %220 = sbr.rel (%p217) target = $region12
      $region11: #{tabmlp1_forward.1} parent=5 // pred_region
        %s221 = ssub.s32 %s17, 1
        // Predicated region
        $region13: #{tabmlp1_forward.1} parent=11 // pred_check
          %p222 = pneg %p55
        $region14: #{tabmlp1_forward.1} parent=11 // pred_check_branch
          %224 = sbr.rel (%p222) target = $region16
        $region15: #{tabmlp1_forward.1} parent=11 // pred_region
          %s226 = ssub.s32 128, 128
          %227 = vsyncadd [#allocation6], %s226
          %s228 = smul.addr %s27, 128
          %s229 = scalar_lea.hbm %s0, %s228
          %s231 = sshll.u32 [#allocation5], 4
          %s232 = int_to_ptr.vmem [resolvable:$true] %s231
          %234 = dma.hbm_to_vmem [thread:$0]  %s229, 128, %s232, [#allocation6]
        $region16: #{tabmlp1_forward.1} parent=11 // pred_fallthru
          _
        // Predicated region
        $region17: #{tabmlp1_forward.1} parent=11 // pred_check
          %p235 = pneg %p76
        $region18: #{tabmlp1_forward.1} parent=11 // pred_check_branch
          %237 = sbr.rel (%p235) target = $region20
        $region19: #{tabmlp1_forward.1} parent=11 // pred_region
          %s239 = ssub.s32 2048, 2048
          %240 = vsyncadd [#allocation8], %s239
          %s241 = sshll.u32 [#allocation7], 4
          %s242 = int_to_ptr.vmem [resolvable:$true] %s241
          %247 = dma.hbm_to_vmem [thread:$0]  %s1, 2048, %s242, [#allocation8], 1024, 1024, 64
        $region20: #{tabmlp1_forward.1} parent=11 // pred_fallthru
          _
        // Predicated region
        $region21: #{tabmlp1_forward.1} parent=11 // pred_check
          %p248 = pneg %p97
        $region22: #{tabmlp1_forward.1} parent=11 // pred_check_branch
          %250 = sbr.rel (%p248) target = $region24
        $region23: #{tabmlp1_forward.1} parent=11 // pred_region
          _
        $region24: #{tabmlp1_forward.1} parent=11 // pred_fallthru
          _
        // Predicated region
        $region25: #{tabmlp1_forward.1} parent=11 // pred_check
          %p251 = pneg %p118
        $region26: #{tabmlp1_forward.1} parent=11 // pred_check_branch
          %253 = sbr.rel (%p251) target = $region28
        $region27: #{tabmlp1_forward.1} parent=11 // pred_region
          _
        $region28: #{tabmlp1_forward.1} parent=11 // pred_fallthru
          _
        // Predicated region
        $region29: #{tabmlp1_forward.1} parent=11 // pred_check
          %p254 = pneg %p139
        $region30: #{tabmlp1_forward.1} parent=11 // pred_check_branch
          %256 = sbr.rel (%p254) target = $region32
        $region31: #{tabmlp1_forward.1} parent=11 // pred_region
          %s258 = ssub.s32 128, 128
          %259 = vsyncadd [#allocation8], %s258
          %s261 = sshll.u32 [#allocation9], 4
          %s262 = int_to_ptr.vmem [resolvable:$true] %s261
          %264 = dma.hbm_to_vmem [thread:$0]  %s4, 128, %s262, [#allocation8]
        $region32: #{tabmlp1_forward.1} parent=11 // pred_fallthru
          _
        // Predicated region
        $region33: #{tabmlp1_forward.1} parent=11 // pred_check
          %p265 = pneg %p160
        $region34: #{tabmlp1_forward.1} parent=11 // pred_check_branch
          %267 = sbr.rel (%p265) target = $region36
        $region35: #{tabmlp1_forward.1} parent=11 // pred_region
          _
        $region36: #{tabmlp1_forward.1} parent=11 // pred_fallthru
          _
        // Predicated region
        $region37: #{tabmlp1_forward.1} parent=11 // pred_check
          %p268 = pneg %p181
        $region38: #{tabmlp1_forward.1} parent=11 // pred_check_branch
          %270 = sbr.rel (%p268) target = $region40
        $region39: #{tabmlp1_forward.1} parent=11 // pred_region
          _
        $region40: #{tabmlp1_forward.1} parent=11 // pred_fallthru
          _
      $region12: #{tabmlp1_forward.1} parent=5 // pred_fallthru
        _
      %p271 = scmp.lt.s32.totalorder %s17, 2
      // Predicated region
      $region41: #{tabmlp1_forward.1} parent=5 // pred_check
        %p272 = pneg %p271
      $region42: #{tabmlp1_forward.1} parent=5 // pred_check_branch
        %274 = sbr.rel (%p272) target = $region44
      $region43: #{tabmlp1_forward.1} parent=5 // pred_region
        _
      $region44: #{tabmlp1_forward.1} parent=5 // pred_fallthru
        _
      %p275 = scmp.le.s32.totalorder 1, %s17
      %p276 = scmp.lt.s32.totalorder %s17, 3
      %p277 = pnand %p275, %p276
      %p278 = pneg %p277
      // Predicated region
      $region45: #{tabmlp1_forward.1} parent=5 // pred_check
        _
      $region46: #{tabmlp1_forward.1} parent=5 // pred_check_branch
        %280 = sbr.rel (%p277) target = $region48
      $region47: #{tabmlp1_forward.1} parent=5 // pred_region
        %s281 = ssub.s32 %s17, 1
        // Predicated region
        $region49: #{tabmlp1_forward.1} parent=47 // pred_check
          %p282 = pneg %p55
        $region50: #{tabmlp1_forward.1} parent=47 // pred_check_branch
          %284 = sbr.rel (%p282) target = $region52
        $region51: #{tabmlp1_forward.1} parent=47 // pred_region
          %285 = dma.done [#allocation6], 128
        $region52: #{tabmlp1_forward.1} parent=47 // pred_fallthru
          _
        // Predicated region
        $region53: #{tabmlp1_forward.1} parent=47 // pred_check
          %p286 = pneg %p76
        $region54: #{tabmlp1_forward.1} parent=47 // pred_check_branch
          %288 = sbr.rel (%p286) target = $region56
        $region55: #{tabmlp1_forward.1} parent=47 // pred_region
          %289 = dma.done [#allocation8], 2048
        $region56: #{tabmlp1_forward.1} parent=47 // pred_fallthru
          _
        // Predicated region
        $region57: #{tabmlp1_forward.1} parent=47 // pred_check
          %p290 = pneg %p139
        $region58: #{tabmlp1_forward.1} parent=47 // pred_check_branch
          %292 = sbr.rel (%p290) target = $region60
        $region59: #{tabmlp1_forward.1} parent=47 // pred_region
          %293 = dma.done [#allocation8], 128
        $region60: #{tabmlp1_forward.1} parent=47 // pred_fallthru
          _
        %p294 = pneg %p55
        %p295 = pneg %p52
        %p296 = pneg %p76
        %p297 = pneg %p73
        %p298 = pneg %p97
        %p299 = pneg %p94
        %p300 = pneg %p118
        %p301 = pneg %p115
        %p302 = pneg %p139
        %p303 = pneg %p136
        %p304 = pneg %p160
        %p305 = pneg %p157
        %p306 = pneg %p181
        %p307 = pneg %p178
        %p308 = pneg %p207
        %p309 = pneg %p204
        %p310 = scmp.lt.s32.totalorder %s27, 0
        %s311 = scalar_select %p310, %s27, 0
        %s312 = smul.addr %s311, 8
        %s313 = scalar_lea.vmem %s7, %s312
        %p314 = scmp.lt.s32.totalorder %s27, 0
        %s315 = scalar_select %p314, %s27, 0
        %s316 = smul.addr %s315, 8
        %s317 = scalar_lea.vmem %s7, %s316
        %v318 = vld [vmem:[#allocation5] sm:$0xff]
        %v319 = vld [vmem:[#allocation7] sm:$0xff]
        %v320 = vld [vmem:[#allocation7 + $0x8] sm:$0xff]
        %v321 = vld [vmem:[#allocation7 + $0x10] sm:$0xff]
        %v322 = vld [vmem:[#allocation7 + $0x18] sm:$0xff]
        %v323 = vld [vmem:[#allocation7 + $0x20] sm:$0xff]
        %v324 = vld [vmem:[#allocation7 + $0x28] sm:$0xff]
        %v325 = vld [vmem:[#allocation7 + $0x30] sm:$0xff]
        %v326 = vld [vmem:[#allocation7 + $0x38] sm:$0xff]
        %v327 = vld [vmem:[#allocation7 + $0x40] sm:$0xf]
        %v328 = vld [vmem:[#allocation7 + $0x48] sm:$0xf]
        %v329 = vld [vmem:[#allocation7 + $0x50] sm:$0xf]
        %v330 = vld [vmem:[#allocation7 + $0x58] sm:$0xf]
        %v331 = vld [vmem:[#allocation7 + $0x60] sm:$0xf]
        %v332 = vld [vmem:[#allocation7 + $0x68] sm:$0xf]
        %v333 = vld [vmem:[#allocation7 + $0x70] sm:$0xf]
        %v334 = vld [vmem:[#allocation7 + $0x78] sm:$0xf]
        %v335 = vld [vmem:[%s2] sm:$0xff]
        %v337 = vlaneseq
        %v338 = vshrl.u32 %v337, 7
        %v339 = vsub.s32 0, %v338
        %v340 = vrot.slane %v335, %v339
        %v341 = vlaneseq
        %v342 = vshrl.u32 %v341, 7
        %v343 = vsub.s32 1, %v342
        %v344 = vrot.slane %v335, %v343
        %v345 = vlaneseq
        %v346 = vshrl.u32 %v345, 7
        %v347 = vsub.s32 2, %v346
        %v348 = vrot.slane %v335, %v347
        %v349 = vlaneseq
        %v350 = vshrl.u32 %v349, 7
        %v351 = vsub.s32 3, %v350
        %v352 = vrot.slane %v335, %v351
        %v353 = vlaneseq
        %v354 = vshrl.u32 %v353, 7
        %v355 = vsub.s32 4, %v354
        %v356 = vrot.slane %v335, %v355
        %v357 = vlaneseq
        %v358 = vshrl.u32 %v357, 7
        %v359 = vsub.s32 5, %v358
        %v360 = vrot.slane %v335, %v359
        %v361 = vlaneseq
        %v362 = vshrl.u32 %v361, 7
        %v363 = vsub.s32 6, %v362
        %v364 = vrot.slane %v335, %v363
        %v365 = vlaneseq
        %v366 = vshrl.u32 %v365, 7
        %v367 = vsub.s32 7, %v366
        %v368 = vrot.slane %v335, %v367
        %vm377 = vcmask 97280
        %v379 = vsel %vm377, %v318, 0
        %vm381 = vcmask 1043456
        %v383 = vsel %vm381, %v327, 0
        %v386 = vsel %vm381, %v328, 0
        %v389 = vsel %vm381, %v329, 0
        %v392 = vsel %vm381, %v330, 0
        %v395 = vsel %vm381, %v331, 0
        %v398 = vsel %vm381, %v332, 0
        %v401 = vsel %vm381, %v333, 0
        %v404 = vsel %vm381, %v334, 0
        %406 = vmatprep.subr.mxu0 %v320
        %407 = vmatpush1.msra.mxu0 %v319
        %408 = vmatprep.subr.mxu0 %v386
        %409 = vmatpush1.msra.mxu0 %v383
        %410 = vmatprep.subr.mxu0 0.0
        %411 = vmatpush1.msra.mxu0 0.0
        %412 = vmatprep.subr.mxu0 0.0
        %413 = vmatpush1.msra.mxu0 0.0
        %414 = vmatprep.subr.mxu0 0.0
        %415 = vmatpush1.msra.mxu0 0.0
        %416 = vmatprep.subr.mxu0 0.0
        %417 = vmatpush1.msra.mxu0 0.0
        %418 = vmatprep.subr.mxu0 0.0
        %419 = vmatpush1.msra.mxu0 0.0
        %420 = vmatprep.subr.mxu0 0.0
        %421 = vmatpush1.msra.mxu0 0.0
        %422 = vmatprep.subr.mxu0 0.0
        %423 = vmatpush1.msra.mxu0 0.0
        %424 = vmatprep.subr.mxu0 0.0
        %425 = vmatpush1.msra.mxu0 0.0
        %426 = vmatprep.subr.mxu0 0.0
        %427 = vmatpush1.msra.mxu0 0.0
        %428 = vmatprep.subr.mxu0 0.0
        %429 = vmatpush1.msra.mxu0 0.0
        %430 = vmatprep.subr.mxu0 0.0
        %431 = vmatpush1.msra.mxu0 0.0
        %432 = vmatprep.subr.mxu0 0.0
        %433 = vmatpush1.msra.mxu0 0.0
        %434 = vmatprep.subr.mxu0 0.0
        %435 = vmatpush1.msra.mxu0 0.0
        %436 = vmatprep.subr.mxu0 0.0
        %437 = vmatpush1.msra.mxu0 0.0
        %438 = vmatprep.subr.mxu0 0.0
        %439 = vmatpush1.msra.mxu0 0.0
        %440 = vmatprep.subr.mxu0 0.0
        %441 = vmatpush1.msra.mxu0 0.0
        %442 = vmatprep.subr.mxu0 0.0
        %443 = vmatpush1.msra.mxu0 0.0
        %444 = vmatprep.subr.mxu0 0.0
        %445 = vmatpush1.msra.mxu0 0.0
        %446 = vmatprep.subr.mxu0 0.0
        %447 = vmatpush1.msra.mxu0 0.0
        %448 = vmatprep.subr.mxu0 0.0
        %449 = vmatpush1.msra.mxu0 0.0
        %450 = vmatprep.subr.mxu0 0.0
        %451 = vmatpush1.msra.mxu0 0.0
        %452 = vmatprep.subr.mxu0 0.0
        %453 = vmatpush1.msra.mxu0 0.0
        %454 = vmatprep.subr.mxu0 0.0
        %455 = vmatpush1.msra.mxu0 0.0
        %456 = vmatprep.subr.mxu0 0.0
        %457 = vmatpush1.msra.mxu0 0.0
        %458 = vmatprep.subr.mxu0 0.0
        %459 = vmatpush1.msra.mxu0 0.0
        %460 = vmatprep.subr.mxu0 0.0
        %461 = vmatpush1.msra.mxu0 0.0
        %462 = vmatprep.subr.mxu0 0.0
        %463 = vmatpush1.msra.mxu0 0.0
        %464 = vmatprep.subr.mxu0 0.0
        %465 = vmatpush1.msra.mxu0 0.0
        %466 = vmatprep.subr.mxu0 0.0
        %467 = vmatpush1.msra.mxu0 0.0
        %468 = vmatprep.subr.mxu0 0.0
        %469 = vmatpush1.msra.mxu0 0.0
        %470 = vmatprep.mubr.f32.mxu0 0.0
        %471 = vmatmul.mubr.f32.gmra.mrb[0].mxu0 %v379
        %v472 = vpop.f32.mrb[0].mxu0
        %v473 = vadd.f32 %v340, %v472
        %v474 = vpop.f32.mrb[0].mxu0
        %v475 = vadd.f32 %v344, %v474
        %476 = vdwg.mxu0
        %477 = vmatprep.subr.mxu0 %v322
        %478 = vmatpush1.msra.mxu0 %v321
        %479 = vmatprep.subr.mxu0 %v392
        %480 = vmatpush1.msra.mxu0 %v389
        %481 = vmatprep.subr.mxu0 0.0
        %482 = vmatpush1.msra.mxu0 0.0
        %483 = vmatprep.subr.mxu0 0.0
        %484 = vmatpush1.msra.mxu0 0.0
        %485 = vmatprep.subr.mxu0 0.0
        %486 = vmatpush1.msra.mxu0 0.0
        %487 = vmatprep.subr.mxu0 0.0
        %488 = vmatpush1.msra.mxu0 0.0
        %489 = vmatprep.subr.mxu0 0.0
        %490 = vmatpush1.msra.mxu0 0.0
        %491 = vmatprep.subr.mxu0 0.0
        %492 = vmatpush1.msra.mxu0 0.0
        %493 = vmatprep.subr.mxu0 0.0
        %494 = vmatpush1.msra.mxu0 0.0
        %495 = vmatprep.subr.mxu0 0.0
        %496 = vmatpush1.msra.mxu0 0.0
        %497 = vmatprep.subr.mxu0 0.0
        %498 = vmatpush1.msra.mxu0 0.0
        %499 = vmatprep.subr.mxu0 0.0
        %500 = vmatpush1.msra.mxu0 0.0
        %501 = vmatprep.subr.mxu0 0.0
        %502 = vmatpush1.msra.mxu0 0.0
        %503 = vmatprep.subr.mxu0 0.0
        %504 = vmatpush1.msra.mxu0 0.0
        %505 = vmatprep.subr.mxu0 0.0
        %506 = vmatpush1.msra.mxu0 0.0
        %507 = vmatprep.subr.mxu0 0.0
        %508 = vmatpush1.msra.mxu0 0.0
        %509 = vmatprep.subr.mxu0 0.0
        %510 = vmatpush1.msra.mxu0 0.0
        %511 = vmatprep.subr.mxu0 0.0
        %512 = vmatpush1.msra.mxu0 0.0
        %513 = vmatprep.subr.mxu0 0.0
        %514 = vmatpush1.msra.mxu0 0.0
        %515 = vmatprep.subr.mxu0 0.0
        %516 = vmatpush1.msra.mxu0 0.0
        %517 = vmatprep.subr.mxu0 0.0
        %518 = vmatpush1.msra.mxu0 0.0
        %519 = vmatprep.subr.mxu0 0.0
        %520 = vmatpush1.msra.mxu0 0.0
        %521 = vmatprep.subr.mxu0 0.0
        %522 = vmatpush1.msra.mxu0 0.0
        %523 = vmatprep.subr.mxu0 0.0
        %524 = vmatpush1.msra.mxu0 0.0
        %525 = vmatprep.subr.mxu0 0.0
        %526 = vmatpush1.msra.mxu0 0.0
        %527 = vmatprep.subr.mxu0 0.0
        %528 = vmatpush1.msra.mxu0 0.0
        %529 = vmatprep.subr.mxu0 0.0
        %530 = vmatpush1.msra.mxu0 0.0
        %531 = vmatprep.subr.mxu0 0.0
        %532 = vmatpush1.msra.mxu0 0.0
        %533 = vmatprep.subr.mxu0 0.0
        %534 = vmatpush1.msra.mxu0 0.0
        %535 = vmatprep.subr.mxu0 0.0
        %536 = vmatpush1.msra.mxu0 0.0
        %537 = vmatprep.subr.mxu0 0.0
        %538 = vmatpush1.msra.mxu0 0.0
        %539 = vmatprep.subr.mxu0 0.0
        %540 = vmatpush1.msra.mxu0 0.0
        %541 = vmatprep.mubr.f32.mxu0 0.0
        %542 = vmatmul.mubr.f32.gmra.mrb[0].mxu0 %v379
        %v543 = vpop.f32.mrb[0].mxu0
        %v544 = vadd.f32 %v348, %v543
        %v545 = vpop.f32.mrb[0].mxu0
        %v546 = vadd.f32 %v352, %v545
        %547 = vdwg.mxu0
        %548 = vmatprep.subr.mxu0 %v324
        %549 = vmatpush1.msra.mxu0 %v323
        %550 = vmatprep.subr.mxu0 %v398
        %551 = vmatpush1.msra.mxu0 %v395
        %552 = vmatprep.subr.mxu0 0.0
        %553 = vmatpush1.msra.mxu0 0.0
        %554 = vmatprep.subr.mxu0 0.0
        %555 = vmatpush1.msra.mxu0 0.0
        %556 = vmatprep.subr.mxu0 0.0
        %557 = vmatpush1.msra.mxu0 0.0
        %558 = vmatprep.subr.mxu0 0.0
        %559 = vmatpush1.msra.mxu0 0.0
        %560 = vmatprep.subr.mxu0 0.0
        %561 = vmatpush1.msra.mxu0 0.0
        %562 = vmatprep.subr.mxu0 0.0
        %563 = vmatpush1.msra.mxu0 0.0
        %564 = vmatprep.subr.mxu0 0.0
        %565 = vmatpush1.msra.mxu0 0.0
        %566 = vmatprep.subr.mxu0 0.0
        %567 = vmatpush1.msra.mxu0 0.0
        %568 = vmatprep.subr.mxu0 0.0
        %569 = vmatpush1.msra.mxu0 0.0
        %570 = vmatprep.subr.mxu0 0.0
        %571 = vmatpush1.msra.mxu0 0.0
        %572 = vmatprep.subr.mxu0 0.0
        %573 = vmatpush1.msra.mxu0 0.0
        %574 = vmatprep.subr.mxu0 0.0
        %575 = vmatpush1.msra.mxu0 0.0
        %576 = vmatprep.subr.mxu0 0.0
        %577 = vmatpush1.msra.mxu0 0.0
        %578 = vmatprep.subr.mxu0 0.0
        %579 = vmatpush1.msra.mxu0 0.0
        %580 = vmatprep.subr.mxu0 0.0
        %581 = vmatpush1.msra.mxu0 0.0
        %582 = vmatprep.subr.mxu0 0.0
        %583 = vmatpush1.msra.mxu0 0.0
        %584 = vmatprep.subr.mxu0 0.0
        %585 = vmatpush1.msra.mxu0 0.0
        %586 = vmatprep.subr.mxu0 0.0
        %587 = vmatpush1.msra.mxu0 0.0
        %588 = vmatprep.subr.mxu0 0.0
        %589 = vmatpush1.msra.mxu0 0.0
        %590 = vmatprep.subr.mxu0 0.0
        %591 = vmatpush1.msra.mxu0 0.0
        %592 = vmatprep.subr.mxu0 0.0
        %593 = vmatpush1.msra.mxu0 0.0
        %594 = vmatprep.subr.mxu0 0.0
        %595 = vmatpush1.msra.mxu0 0.0
        %596 = vmatprep.subr.mxu0 0.0
        %597 = vmatpush1.msra.mxu0 0.0
        %598 = vmatprep.subr.mxu0 0.0
        %599 = vmatpush1.msra.mxu0 0.0
        %600 = vmatprep.subr.mxu0 0.0
        %601 = vmatpush1.msra.mxu0 0.0
        %602 = vmatprep.subr.mxu0 0.0
        %603 = vmatpush1.msra.mxu0 0.0
        %604 = vmatprep.subr.mxu0 0.0
        %605 = vmatpush1.msra.mxu0 0.0
        %606 = vmatprep.subr.mxu0 0.0
        %607 = vmatpush1.msra.mxu0 0.0
        %608 = vmatprep.subr.mxu0 0.0
        %609 = vmatpush1.msra.mxu0 0.0
        %610 = vmatprep.subr.mxu0 0.0
        %611 = vmatpush1.msra.mxu0 0.0
        %612 = vmatprep.mubr.f32.mxu0 0.0
        %613 = vmatmul.mubr.f32.gmra.mrb[0].mxu0 %v379
        %v614 = vpop.f32.mrb[0].mxu0
        %v615 = vadd.f32 %v356, %v614
        %v616 = vpop.f32.mrb[0].mxu0
        %v617 = vadd.f32 %v360, %v616
        %618 = vdwg.mxu0
        %619 = vmatprep.subr.mxu0 %v326
        %620 = vmatpush1.msra.mxu0 %v325
        %621 = vmatprep.subr.mxu0 %v404
        %622 = vmatpush1.msra.mxu0 %v401
        %623 = vmatprep.subr.mxu0 0.0
        %624 = vmatpush1.msra.mxu0 0.0
        %625 = vmatprep.subr.mxu0 0.0
        %626 = vmatpush1.msra.mxu0 0.0
        %627 = vmatprep.subr.mxu0 0.0
        %628 = vmatpush1.msra.mxu0 0.0
        %629 = vmatprep.subr.mxu0 0.0
        %630 = vmatpush1.msra.mxu0 0.0
        %631 = vmatprep.subr.mxu0 0.0
        %632 = vmatpush1.msra.mxu0 0.0
        %633 = vmatprep.subr.mxu0 0.0
        %634 = vmatpush1.msra.mxu0 0.0
        %635 = vmatprep.subr.mxu0 0.0
        %636 = vmatpush1.msra.mxu0 0.0
        %637 = vmatprep.subr.mxu0 0.0
        %638 = vmatpush1.msra.mxu0 0.0
        %639 = vmatprep.subr.mxu0 0.0
        %640 = vmatpush1.msra.mxu0 0.0
        %641 = vmatprep.subr.mxu0 0.0
        %642 = vmatpush1.msra.mxu0 0.0
        %643 = vmatprep.subr.mxu0 0.0
        %644 = vmatpush1.msra.mxu0 0.0
        %645 = vmatprep.subr.mxu0 0.0
        %646 = vmatpush1.msra.mxu0 0.0
        %647 = vmatprep.subr.mxu0 0.0
        %648 = vmatpush1.msra.mxu0 0.0
        %649 = vmatprep.subr.mxu0 0.0
        %650 = vmatpush1.msra.mxu0 0.0
        %651 = vmatprep.subr.mxu0 0.0
        %652 = vmatpush1.msra.mxu0 0.0
        %653 = vmatprep.subr.mxu0 0.0
        %654 = vmatpush1.msra.mxu0 0.0
        %655 = vmatprep.subr.mxu0 0.0
        %656 = vmatpush1.msra.mxu0 0.0
        %657 = vmatprep.subr.mxu0 0.0
        %658 = vmatpush1.msra.mxu0 0.0
        %659 = vmatprep.subr.mxu0 0.0
        %660 = vmatpush1.msra.mxu0 0.0
        %661 = vmatprep.subr.mxu0 0.0
        %662 = vmatpush1.msra.mxu0 0.0
        %663 = vmatprep.subr.mxu0 0.0
        %664 = vmatpush1.msra.mxu0 0.0
        %665 = vmatprep.subr.mxu0 0.0
        %666 = vmatpush1.msra.mxu0 0.0
        %667 = vmatprep.subr.mxu0 0.0
        %668 = vmatpush1.msra.mxu0 0.0
        %669 = vmatprep.subr.mxu0 0.0
        %670 = vmatpush1.msra.mxu0 0.0
        %671 = vmatprep.subr.mxu0 0.0
        %672 = vmatpush1.msra.mxu0 0.0
        %673 = vmatprep.subr.mxu0 0.0
        %674 = vmatpush1.msra.mxu0 0.0
        %675 = vmatprep.subr.mxu0 0.0
        %676 = vmatpush1.msra.mxu0 0.0
        %677 = vmatprep.subr.mxu0 0.0
        %678 = vmatpush1.msra.mxu0 0.0
        %679 = vmatprep.subr.mxu0 0.0
        %680 = vmatpush1.msra.mxu0 0.0
        %681 = vmatprep.subr.mxu0 0.0
        %682 = vmatpush1.msra.mxu0 0.0
        %683 = vmatprep.mubr.f32.mxu0 0.0
        %684 = vmatmul.mubr.f32.gmra.mrb[0].mxu0 %v379
        %v685 = vpop.f32.mrb[0].mxu0
        %v686 = vadd.f32 %v364, %v685
        %v687 = vpop.f32.mrb[0].mxu0
        %v688 = vadd.f32 %v368, %v687
        %689 = vdwg.mxu0
        %v690 = vmax.f32 %v473, 0.0
        %v691 = vmax.f32 %v475, 0.0
        %v692 = vmax.f32 %v544, 0.0
        %v693 = vmax.f32 %v546, 0.0
        %v694 = vmax.f32 %v615, 0.0
        %v695 = vmax.f32 %v617, 0.0
        %v696 = vmax.f32 %v686, 0.0
        %v697 = vmax.f32 %v688, 0.0
        %p698 = scmp.eq.s32.totalorder %s26, 0
        %p699 = scmp.eq.s32.totalorder %s27, 0
        %p700 = pnand %p698, %p699
        %p701 = pneg %p700
        // Predicated region
        $region61: #{tabmlp1_forward.1} parent=47 // pred_check
          _
        $region62: #{tabmlp1_forward.1} parent=47 // pred_check_branch
          %703 = sbr.rel (%p700) target = $region64
        $region63: #{tabmlp1_forward.1} parent=47 // pred_region
          %704 = vst [vmem:[#allocation2] sm:$0xff] 0.0
          %705 = vst [vmem:[#allocation3] sm:$0xff] 0.0
        $region64: #{tabmlp1_forward.1} parent=47 // pred_fallthru
          _
        // Predicated region
        $region65: #{tabmlp1_forward.1} parent=47 // pred_check
          %p706 = pneg %p698
        $region66: #{tabmlp1_forward.1} parent=47 // pred_check_branch
          %708 = sbr.rel (%p706) target = $region68
        $region67: #{tabmlp1_forward.1} parent=47 // pred_region
          %v709 = vld [vmem:[#allocation2] sm:$0xff]
          %v710 = vrot.slane %v690, 4
          %v711 = vadd.f32 %v690, %v710
          %v712 = vrot.slane %v711, 2
          %v713 = vadd.f32 %v711, %v712
          %v714 = vrot.slane %v713, 1
          %v715 = vadd.f32 %v713, %v714
          %v716 = vrot.slane %v691, 4
          %v717 = vadd.f32 %v691, %v716
          %v718 = vrot.slane %v717, 2
          %v719 = vadd.f32 %v717, %v718
          %v720 = vrot.slane %v719, 1
          %v721 = vadd.f32 %v719, %v720
          %v722 = vrot.slane %v692, 4
          %v723 = vadd.f32 %v692, %v722
          %v724 = vrot.slane %v723, 2
          %v725 = vadd.f32 %v723, %v724
          %v726 = vrot.slane %v725, 1
          %v727 = vadd.f32 %v725, %v726
          %v728 = vrot.slane %v693, 4
          %v729 = vadd.f32 %v693, %v728
          %v730 = vrot.slane %v729, 2
          %v731 = vadd.f32 %v729, %v730
          %v732 = vrot.slane %v731, 1
          %v733 = vadd.f32 %v731, %v732
          %v734 = vrot.slane %v694, 4
          %v735 = vadd.f32 %v694, %v734
          %v736 = vrot.slane %v735, 2
          %v737 = vadd.f32 %v735, %v736
          %v738 = vrot.slane %v737, 1
          %v739 = vadd.f32 %v737, %v738
          %v740 = vrot.slane %v695, 4
          %v741 = vadd.f32 %v695, %v740
          %v742 = vrot.slane %v741, 2
          %v743 = vadd.f32 %v741, %v742
          %v744 = vrot.slane %v743, 1
          %v745 = vadd.f32 %v743, %v744
          %v746 = vrot.slane %v696, 4
          %v747 = vadd.f32 %v696, %v746
          %v748 = vrot.slane %v747, 2
          %v749 = vadd.f32 %v747, %v748
          %v750 = vrot.slane %v749, 1
          %v751 = vadd.f32 %v749, %v750
          %v752 = vrot.slane %v697, 4
          %v753 = vadd.f32 %v697, %v752
          %v754 = vrot.slane %v753, 2
          %v755 = vadd.f32 %v753, %v754
          %v756 = vrot.slane %v755, 1
          %v757 = vadd.f32 %v755, %v756
          %v766 = vcombine.low %v715, %v721
          %v767 = vcombine.low %v727, %v733
          %v768 = vcombine.low %v739, %v745
          %v769 = vcombine.low %v751, %v757
          %v771 = vunpack.c.l.s4 1966171168
          %v772 = vunpack.c.0.s8 %v771
          %v773 = vlaneseq
          %v774 = vshrl.u32 %v773, 7
          %v775 = vsub.s32 %v772, %v774
          %v776 = vrot.slane %v766, %v775
          %v778 = vunpack.c.l.s4 1966171168
          %v779 = vunpack.c.0.s8 %v778
          %v780 = vlaneseq
          %v781 = vshrl.u32 %v780, 7
          %v782 = vsub.s32 %v779, %v781
          %v783 = vrot.slane %v767, %v782
          %v785 = vunpack.c.l.s4 1966171168
          %v786 = vunpack.c.0.s8 %v785
          %v787 = vlaneseq
          %v788 = vshrl.u32 %v787, 7
          %v789 = vsub.s32 %v786, %v788
          %v790 = vrot.slane %v768, %v789
          %v792 = vunpack.c.l.s4 1966171168
          %v793 = vunpack.c.0.s8 %v792
          %v794 = vlaneseq
          %v795 = vshrl.u32 %v794, 7
          %v796 = vsub.s32 %v793, %v795
          %v797 = vrot.slane %v769, %v796
          %v798 = vcombine.low %v776, %v783
          %v799 = vcombine.low %v790, %v797
          %v801 = vunpack.c.l.s4 1966171168
          %v802 = vunpack.c.0.s8 %v801
          %v803 = vlaneseq
          %v804 = vshrl.u32 %v803, 7
          %v805 = vsub.s32 %v802, %v804
          %v806 = vrot.slane %v798, %v805
          %v808 = vunpack.c.l.s4 1966171168
          %v809 = vunpack.c.0.s8 %v808
          %v810 = vlaneseq
          %v811 = vshrl.u32 %v810, 7
          %v812 = vsub.s32 %v809, %v811
          %v813 = vrot.slane %v799, %v812
          %v814 = vcombine.low %v806, %v813
          %v816 = vadd.f32 %v709, %v814
          %817 = vst [vmem:[#allocation2] sm:$0xff] %v816
          %v818 = vld [vmem:[#allocation3] sm:$0xff]
          %v819 = vmul.f32 %v690, %v690
          %v820 = vmul.f32 %v691, %v691
          %v821 = vmul.f32 %v692, %v692
          %v822 = vmul.f32 %v693, %v693
          %v823 = vmul.f32 %v694, %v694
          %v824 = vmul.f32 %v695, %v695
          %v825 = vmul.f32 %v696, %v696
          %v826 = vmul.f32 %v697, %v697
          %v827 = vrot.slane %v819, 4
          %v828 = vadd.f32 %v819, %v827
          %v829 = vrot.slane %v828, 2
          %v830 = vadd.f32 %v828, %v829
          %v831 = vrot.slane %v830, 1
          %v832 = vadd.f32 %v830, %v831
          %v833 = vrot.slane %v820, 4
          %v834 = vadd.f32 %v820, %v833
          %v835 = vrot.slane %v834, 2
          %v836 = vadd.f32 %v834, %v835
          %v837 = vrot.slane %v836, 1
          %v838 = vadd.f32 %v836, %v837
          %v839 = vrot.slane %v821, 4
          %v840 = vadd.f32 %v821, %v839
          %v841 = vrot.slane %v840, 2
          %v842 = vadd.f32 %v840, %v841
          %v843 = vrot.slane %v842, 1
          %v844 = vadd.f32 %v842, %v843
          %v845 = vrot.slane %v822, 4
          %v846 = vadd.f32 %v822, %v845
          %v847 = vrot.slane %v846, 2
          %v848 = vadd.f32 %v846, %v847
          %v849 = vrot.slane %v848, 1
          %v850 = vadd.f32 %v848, %v849
          %v851 = vrot.slane %v823, 4
          %v852 = vadd.f32 %v823, %v851
          %v853 = vrot.slane %v852, 2
          %v854 = vadd.f32 %v852, %v853
          %v855 = vrot.slane %v854, 1
          %v856 = vadd.f32 %v854, %v855
          %v857 = vrot.slane %v824, 4
          %v858 = vadd.f32 %v824, %v857
          %v859 = vrot.slane %v858, 2
          %v860 = vadd.f32 %v858, %v859
          %v861 = vrot.slane %v860, 1
          %v862 = vadd.f32 %v860, %v861
          %v863 = vrot.slane %v825, 4
          %v864 = vadd.f32 %v825, %v863
          %v865 = vrot.slane %v864, 2
          %v866 = vadd.f32 %v864, %v865
          %v867 = vrot.slane %v866, 1
          %v868 = vadd.f32 %v866, %v867
          %v869 = vrot.slane %v826, 4
          %v870 = vadd.f32 %v826, %v869
          %v871 = vrot.slane %v870, 2
          %v872 = vadd.f32 %v870, %v871
          %v873 = vrot.slane %v872, 1
          %v874 = vadd.f32 %v872, %v873
          %v883 = vcombine.low %v832, %v838
          %v884 = vcombine.low %v844, %v850
          %v885 = vcombine.low %v856, %v862
          %v886 = vcombine.low %v868, %v874
          %v888 = vunpack.c.l.s4 1966171168
          %v889 = vunpack.c.0.s8 %v888
          %v890 = vlaneseq
          %v891 = vshrl.u32 %v890, 7
          %v892 = vsub.s32 %v889, %v891
          %v893 = vrot.slane %v883, %v892
          %v895 = vunpack.c.l.s4 1966171168
          %v896 = vunpack.c.0.s8 %v895
          %v897 = vlaneseq
          %v898 = vshrl.u32 %v897, 7
          %v899 = vsub.s32 %v896, %v898
          %v900 = vrot.slane %v884, %v899
          %v902 = vunpack.c.l.s4 1966171168
          %v903 = vunpack.c.0.s8 %v902
          %v904 = vlaneseq
          %v905 = vshrl.u32 %v904, 7
          %v906 = vsub.s32 %v903, %v905
          %v907 = vrot.slane %v885, %v906
          %v909 = vunpack.c.l.s4 1966171168
          %v910 = vunpack.c.0.s8 %v909
          %v911 = vlaneseq
          %v912 = vshrl.u32 %v911, 7
          %v913 = vsub.s32 %v910, %v912
          %v914 = vrot.slane %v886, %v913
          %v915 = vcombine.low %v893, %v900
          %v916 = vcombine.low %v907, %v914
          %v918 = vunpack.c.l.s4 1966171168
          %v919 = vunpack.c.0.s8 %v918
          %v920 = vlaneseq
          %v921 = vshrl.u32 %v920, 7
          %v922 = vsub.s32 %v919, %v921
          %v923 = vrot.slane %v915, %v922
          %v925 = vunpack.c.l.s4 1966171168
          %v926 = vunpack.c.0.s8 %v925
          %v927 = vlaneseq
          %v928 = vshrl.u32 %v927, 7
          %v929 = vsub.s32 %v926, %v928
          %v930 = vrot.slane %v916, %v929
          %v931 = vcombine.low %v923, %v930
          %v933 = vadd.f32 %v818, %v931
          %934 = vst [vmem:[#allocation3] sm:$0xff] %v933
          %vm935 = vcmask 7168
          %936 = vst.msk [vmem:[%s317] sm:$0xff] %vm935, 0.0
        $region68: #{tabmlp1_forward.1} parent=47 // pred_fallthru
          _
        %p937 = scmp.eq.s32.totalorder %s26, 1
        // Predicated region
        $region69: #{tabmlp1_forward.1} parent=47 // pred_check
          %p938 = pneg %p937
        $region70: #{tabmlp1_forward.1} parent=47 // pred_check_branch
          %940 = sbr.rel (%p938) target = $region72
        $region71: #{tabmlp1_forward.1} parent=47 // pred_region
          %v941 = vld [vmem:[#allocation2] sm:$0xff]
          %v942 = vmul.f32 %v941, 0.125
          %v943 = vld [vmem:[#allocation3] sm:$0xff]
          %v944 = vmul.f32 %v943, 0.125
          %v945 = vmul.f32 %v942, %v942
          %v946 = vsub.f32 %v944, %v945
          %v947 = vmax.f32 %v946, 0.0
          %v948 = vld [vmem:[%s3] sm:$0xff]
          %v949 = vadd.f32 %v947, 1e-05
          %v950 = vrsqrt.pop %v949
          %v951 = vmul.f32 %v948, %v950
          %v952 = vld [vmem:[%s5] sm:$0xff]
          %v953 = vmul.f32 %v952, %v951
          %v954 = vld [vmem:[#allocation9] sm:$0xff]
          %v955 = vmul.f32 %v942, %v951
          %v956 = vsub.f32 %v954, %v955
          %v957 = vmul.f32 %v956, %v952
          %v959 = vlaneseq
          %v960 = vshrl.u32 %v959, 7
          %v961 = vsub.s32 0, %v960
          %v962 = vrot.slane %v957, %v961
          %v963 = vlaneseq
          %v964 = vshrl.u32 %v963, 7
          %v965 = vsub.s32 1, %v964
          %v966 = vrot.slane %v957, %v965
          %v967 = vlaneseq
          %v968 = vshrl.u32 %v967, 7
          %v969 = vsub.s32 2, %v968
          %v970 = vrot.slane %v957, %v969
          %v971 = vlaneseq
          %v972 = vshrl.u32 %v971, 7
          %v973 = vsub.s32 3, %v972
          %v974 = vrot.slane %v957, %v973
          %v975 = vlaneseq
          %v976 = vshrl.u32 %v975, 7
          %v977 = vsub.s32 4, %v976
          %v978 = vrot.slane %v957, %v977
          %v979 = vlaneseq
          %v980 = vshrl.u32 %v979, 7
          %v981 = vsub.s32 5, %v980
          %v982 = vrot.slane %v957, %v981
          %v983 = vlaneseq
          %v984 = vshrl.u32 %v983, 7
          %v985 = vsub.s32 6, %v984
          %v986 = vrot.slane %v957, %v985
          %v987 = vlaneseq
          %v988 = vshrl.u32 %v987, 7
          %v989 = vsub.s32 7, %v988
          %v990 = vrot.slane %v957, %v989
          %vm999 = vcmask 1040384
          %v1000 = vsel %vm999, %v962, 0.0
          %v1001 = vsel %vm999, %v966, 0.0
          %v1002 = vadd.f32 %v1000, %v1001
          %v1003 = vsel %vm999, %v970, 0.0
          %v1004 = vadd.f32 %v1002, %v1003
          %v1005 = vsel %vm999, %v974, 0.0
          %v1006 = vadd.f32 %v1004, %v1005
          %v1007 = vsel %vm999, %v978, 0.0
          %v1008 = vadd.f32 %v1006, %v1007
          %v1009 = vsel %vm999, %v982, 0.0
          %v1010 = vadd.f32 %v1008, %v1009
          %v1011 = vsel %vm999, %v986, 0.0
          %v1012 = vadd.f32 %v1010, %v1011
          %v1013 = vsel %vm999, %v990, 0.0
          %v1014 = vadd.f32 %v1012, %v1013
          %1015 = vadd.xlane.f32.xlu0 %v1014
          %v1016 = vpop.xlane.xlu0 %1015
          %v1017 = vld [vmem:[#allocation4] sm:$0x1]
          %v1018 = vadd.f32 %v1016, %v1017
          %v1020 = vlaneseq
          %v1021 = vshrl.u32 %v1020, 7
          %v1022 = vsub.s32 0, %v1021
          %v1023 = vrot.slane %v953, %v1022
          %v1024 = vlaneseq
          %v1025 = vshrl.u32 %v1024, 7
          %v1026 = vsub.s32 1, %v1025
          %v1027 = vrot.slane %v953, %v1026
          %v1028 = vlaneseq
          %v1029 = vshrl.u32 %v1028, 7
          %v1030 = vsub.s32 2, %v1029
          %v1031 = vrot.slane %v953, %v1030
          %v1032 = vlaneseq
          %v1033 = vshrl.u32 %v1032, 7
          %v1034 = vsub.s32 3, %v1033
          %v1035 = vrot.slane %v953, %v1034
          %v1036 = vlaneseq
          %v1037 = vshrl.u32 %v1036, 7
          %v1038 = vsub.s32 4, %v1037
          %v1039 = vrot.slane %v953, %v1038
          %v1040 = vlaneseq
          %v1041 = vshrl.u32 %v1040, 7
          %v1042 = vsub.s32 5, %v1041
          %v1043 = vrot.slane %v953, %v1042
          %v1044 = vlaneseq
          %v1045 = vshrl.u32 %v1044, 7
          %v1046 = vsub.s32 6, %v1045
          %v1047 = vrot.slane %v953, %v1046
          %v1048 = vlaneseq
          %v1049 = vshrl.u32 %v1048, 7
          %v1050 = vsub.s32 7, %v1049
          %v1051 = vrot.slane %v953, %v1050
          %v1060 = vmul.f32 %v690, %v1023
          %v1061 = vmul.f32 %v691, %v1027
          %v1062 = vmul.f32 %v692, %v1031
          %v1063 = vmul.f32 %v693, %v1035
          %v1064 = vmul.f32 %v694, %v1039
          %v1065 = vmul.f32 %v695, %v1043
          %v1066 = vmul.f32 %v696, %v1047
          %v1067 = vmul.f32 %v697, %v1051
          %v1068 = vadd.f32 %v1060, %v1061
          %v1069 = vadd.f32 %v1068, %v1062
          %v1070 = vadd.f32 %v1069, %v1063
          %v1071 = vadd.f32 %v1070, %v1064
          %v1072 = vadd.f32 %v1071, %v1065
          %v1073 = vadd.f32 %v1072, %v1066
          %v1074 = vadd.f32 %v1073, %v1067
          %1075 = vadd.xlane.f32.xlu0 %v1074
          %v1076 = vpop.xlane.xlu0 %1075
          %v1077 = vlaneseq
          %v1078 = vshrl.u32 %v1077, 7
          %v1079 = vsub.s32 0, %v1078
          %v1080 = vrot.slane %v1018, %v1079
          %v1081 = vadd.f32 %v1076, %v1080
          %vm1082 = vcmask 7168
          %1083 = vst.msk [vmem:[%s317] sm:$0xff] %vm1082, %v1081
        $region72: #{tabmlp1_forward.1} parent=47 // pred_fallthru
          _
        %p1084 = scmp.lt.s32.totalorder %s27, 0
        %s1085 = scalar_select %p1084, %s27, 0
        %s1086 = smul.addr %s1085, 8
        %s1087 = scalar_lea.vmem %s7, %s1086
        // Predicated region
        $region73: #{tabmlp1_forward.1} parent=47 // pred_check
          %p1088 = pneg %p204
        $region74: #{tabmlp1_forward.1} parent=47 // pred_check_branch
          %1090 = sbr.rel (%p1088) target = $region76
        $region75: #{tabmlp1_forward.1} parent=47 // pred_region
          _
        $region76: #{tabmlp1_forward.1} parent=47 // pred_fallthru
          _
        // Predicated region
        $region77: #{tabmlp1_forward.1} parent=47 // pred_check
          %p1091 = pneg %p204
        $region78: #{tabmlp1_forward.1} parent=47 // pred_check_branch
          %1093 = sbr.rel (%p1091) target = $region80
        $region79: #{tabmlp1_forward.1} parent=47 // pred_region
          %p1094 = scmp.lt.s32.totalorder %s27, 0
          %s1095 = scalar_select %p1094, %s27, 0
          %s1096 = smul.addr %s1095, 8
          %s1097 = scalar_lea.vmem %s7, %s1096
        $region80: #{tabmlp1_forward.1} parent=47 // pred_fallthru
          _
      $region48: #{tabmlp1_forward.1} parent=5 // pred_fallthru
        _
      %p1098 = scmp.le.s32.totalorder 2, %s17
      // Predicated region
      $region81: #{tabmlp1_forward.1} parent=5 // pred_check
        %p1099 = pneg %p1098
      $region82: #{tabmlp1_forward.1} parent=5 // pred_check_branch
        %1101 = sbr.rel (%p1099) target = $region84
      $region83: #{tabmlp1_forward.1} parent=5 // pred_region
        %s1102 = ssub.s32 %s17, 2
      $region84: #{tabmlp1_forward.1} parent=5 // pred_fallthru
        _
    $region6: #{tabmlp1_forward.1} parent=1 // loop_footer
      %s21 = sadd.s32 1, %s17
    $region7: #{tabmlp1_forward.1} parent=1 // loop_footer_branch
      %16 = sbr.rel target = $region3
    $region8: #{tabmlp1_forward.1} parent=1 // loop_exit
      _
    %1103 = vsyncpa [#allocation6], 1
    %s1104 = scalar_lea.sflag [#allocation6], 1
    %1105 = vsyncpa %s1104, 1
    %1106 = vsyncpa [#allocation8], 1

</llo_original>
